<compile_context>
chip_gen: v7x
topology: tpu7x:2x2x1
jax: 0.10.0
libtpu: 0.0.40
codegen_flags: <defaults>
</compile_context>

<pallas_src>
import jax
import jax.numpy as jnp
from jax.experimental import pallas as pl
from jax.experimental.pallas import tpu as pltpu

_LANE = 128
_SUBLANE = 8


def _cdiv(a, b):
    return -(-a // b)


def _round_up(x, m):
    return ((x + m - 1) // m) * m


def _linear_kernel(x_ref, w_ref, b_ref, o_ref):
    # x_ref: (tm, in_dim), w_ref: (in_dim, out_dim) [pre-transposed], b_ref: (1, out_dim)
    acc = jnp.dot(x_ref[...], w_ref[...], preferred_element_type=jnp.float32)
    o_ref[...] = (acc + b_ref[...]).astype(o_ref.dtype)


def prepare_linear_params(weight, bias, dtype=None):
    """One-time layout prep: PyTorch (out_dim, in_dim) weight -> (in_dim, out_dim), bias -> (1, out_dim).

    Call ONCE per parameter set and reuse the result with linear_forward_prepared, so the
    transpose is not a per-call HBM read+write of the weight.
    """
    weight = jnp.asarray(weight)
    dtype = dtype or weight.dtype
    w_t = weight.T.astype(dtype)                       # (in_dim, out_dim)
    b2d = jnp.asarray(bias).reshape(1, -1).astype(jnp.float32)
    return w_t, b2d


@jax.jit
def linear_forward_prepared(x, w_t, b2d):
    """y = x @ w_t + b2d  with w_t already in (in_dim, out_dim) layout."""
    batch, in_dim = x.shape
    out_dim = w_t.shape[1]
    itemsize = jnp.dtype(x.dtype).itemsize

    # --- VMEM footprint estimates (lane/sublane padded, as laid out on-chip) ---
    x_row_vmem = _round_up(in_dim, _LANE) * itemsize
    o_row_vmem = _round_up(out_dim, _LANE) * itemsize
    w_vmem = _round_up(in_dim, _SUBLANE) * _round_up(out_dim, _LANE) * jnp.dtype(w_t.dtype).itemsize
    b_vmem = _SUBLANE * _round_up(out_dim, _LANE) * 4
    resident_vmem = 2 * (w_vmem + b_vmem)              # default pipeline double-buffers them

    if resident_vmem > (8 << 20):
        # TODO(synk): add an out_dim (N) grid axis + K-accumulator (pl.when init/accumulate)
        # path for weights too large to keep resident in VMEM (binding on v7x's 64 MiB).
        raise NotImplementedError(
            "Weight does not fit resident in VMEM; K/N-tiled accumulator path not implemented."
        )

    # --- small problems: gridless, whole-array blocks (grid machinery would dominate) ---
    gridless_vmem = _round_up(batch, _SUBLANE) * (x_row_vmem + o_row_vmem) + resident_vmem
    if gridless_vmem <= (8 << 20) or batch < _SUBLANE:
        return pl.pallas_call(
            _linear_kernel,
            out_shape=jax.ShapeDtypeStruct((batch, out_dim), x.dtype),
        )(x, w_t, b2d)

    # --- tiled path: stream the batch axis, keep W^T/bias resident in VMEM ---
    # Target ~2 MiB of real (HBM-side) x data per grid step so per-step DMA dwarfs the
    # ~0.35 us grid-step overhead; cap by a ~20 MiB VMEM budget for the double-buffered
    # streaming tiles (lane-padded), leaving headroom under the 32 MiB scoped limit.
    stream_budget = 20 << 20
    tm_data = (2 << 20) // max(in_dim * itemsize, 1)
    tm_vmem = stream_budget // (2 * (x_row_vmem + o_row_vmem))
    tm = min(tm_vmem, max(tm_data, 512))
    tm = max(_SUBLANE, (tm // _SUBLANE) * _SUBLANE)
    tm = min(tm, (batch // _SUBLANE) * _SUBLANE)       # never exceed the array extent

    nt = _cdiv(batch, tm)
    # v7x has 2 TensorCores: prefer an even tile count so the "parallel" batch axis
    # splits without a 1-tile imbalance (no effect on single-TC v5e/v6e).
    if nt > 1 and nt % 2 == 1:
        tm_even = _round_up(_cdiv(batch, nt + 1), _SUBLANE)
        if _cdiv(batch, tm_even) == nt + 1:
            tm, nt = tm_even, nt + 1

    return pl.pallas_call(
        _linear_kernel,
        out_shape=jax.ShapeDtypeStruct((batch, out_dim), x.dtype),
        grid=(nt,),
        in_specs=[
            pl.BlockSpec((tm, in_dim), lambda i: (i, 0)),        # x: streamed over batch
            pl.BlockSpec((in_dim, out_dim), lambda i: (0, 0)),   # W^T: resident in VMEM
            pl.BlockSpec((1, out_dim), lambda i: (0, 0)),        # bias: resident in VMEM
        ],
        out_specs=pl.BlockSpec((tm, out_dim), lambda i: (i, 0)),
        compiler_params=pltpu.CompilerParams(
            dimension_semantics=("parallel",),   # lets v7x shard batch tiles across both TCs
            vmem_limit_bytes=32 << 20,           # raises v5e's 16 MiB default; == v6e/v7x default
        ),
    )(x, w_t, b2d)


def logistic_regression_forward(x, weight, bias):
    """Drop-in forward for nn.Linear with weight in PyTorch (out_dim, in_dim) layout.

    For production, call prepare_linear_params once and reuse linear_forward_prepared
    so the weight transpose is not paid on every call.
    """
    w_t, b2d = prepare_linear_params(weight, bias, dtype=x.dtype)
    return linear_forward_prepared(x, w_t, b2d)


if __name__ == "__main__":
    # Small shapes consistent with the module: input_dim=32, output_dim=16, batch=8.
    batch, input_dim, output_dim = 8, 32, 16

    key = jax.random.PRNGKey(0)
    kx, kw, kb = jax.random.split(key, 3)

    x = jax.random.normal(kx, (batch, input_dim), dtype=jnp.float32)
    # Deterministic parameter init mimicking nn.Linear's uniform(-1/sqrt(in), 1/sqrt(in)).
    bound = 1.0 / (input_dim ** 0.5)
    weight = jax.random.uniform(
        kw, (output_dim, input_dim), minval=-bound, maxval=bound, dtype=jnp.float32
    )
    bias = jax.random.uniform(
        kb, (output_dim,), minval=-bound, maxval=bound, dtype=jnp.float32
    )

    # --- small (gridless) path ---
    y = logistic_regression_forward(x, weight, bias)
    jax.block_until_ready(y)
    y_ref = x @ weight.T + bias
    assert y.shape == (batch, output_dim)
    assert jnp.allclose(y, y_ref, atol=1e-5, rtol=1e-5)

    # --- tiled (batch-gridded) path with a ragged batch: exercises masked tail block
    #     (no pad / no output slice) and the pre-prepared-parameter entry point.
    w_t, b2d = prepare_linear_params(weight, bias)
    big_batch = 50001
    xb = jax.random.normal(jax.random.PRNGKey(1), (big_batch, input_dim), dtype=jnp.float32)
    yb = linear_forward_prepared(xb, w_t, b2d)
    jax.block_until_ready(yb)
    yb_ref = xb @ weight.T + bias
    assert yb.shape == (big_batch, output_dim)
    assert jnp.allclose(yb, yb_ref, atol=1e-4, rtol=1e-4)

    print("KERNEL_OK")
</pallas_src>

<mosaic_0001>
module attributes {stable_mosaic.version = 11 : i64} {
  func.func @_linear_kernel(%arg0: memref<8x32xf32, #tpu.memory_space<vmem>>, %arg1: memref<32x16xf32, #tpu.memory_space<vmem>>, %arg2: memref<1x16xf32, #tpu.memory_space<vmem>>, %arg3: memref<8x16xf32, #tpu.memory_space<vmem>>) attributes {dimension_semantics = [], scalar_prefetch = 0 : i64, scratch_operands = 0 : i64, tpu.core_type = #tpu.core_type<tc>} {
    %c0 = arith.constant 0 : index
    %c0_0 = arith.constant 0 : index
    %0 = vector.load %arg0[%c0, %c0_0] : memref<8x32xf32, #tpu.memory_space<vmem>>, vector<8x32xf32>
    %c0_1 = arith.constant 0 : index
    %c0_2 = arith.constant 0 : index
    %1 = vector.load %arg1[%c0_1, %c0_2] : memref<32x16xf32, #tpu.memory_space<vmem>>, vector<32x16xf32>
    %cst = arith.constant dense<0.000000e+00> : vector<8x16xf32>
    %2 = tpu.matmul %0, %1, %cst {dimension_numbers = #tpu.dot_dimension_numbers<[1], [0], [0], [1], [0, 0, 1, 1], [], []>} : vector<8x32xf32>, vector<32x16xf32>, vector<8x16xf32> -> vector<8x16xf32>
    %c0_3 = arith.constant 0 : index
    %c0_4 = arith.constant 0 : index
    %3 = vector.load %arg2[%c0_3, %c0_4] : memref<1x16xf32, #tpu.memory_space<vmem>>, vector<1x16xf32>
    %4 = vector.broadcast %3 : vector<1x16xf32> to vector<8x16xf32>
    %5 = arith.addf %2, %4 : vector<8x16xf32>
    %c0_5 = arith.constant 0 : index
    %c0_6 = arith.constant 0 : index
    %6 = vector.load %arg3[%c0_5, %c0_6] : memref<8x16xf32, #tpu.memory_space<vmem>>, vector<8x16xf32>
    tpu.vector_store %arg3[%c0_5, %c0_6], %5 {strides = array<i32>} : memref<8x16xf32, #tpu.memory_space<vmem>>, vector<8x16xf32>,
    return
  }
}

</mosaic_0001>

<llo_original>
// kernel: linear_forward_prepared.1
$region0: #{linear_forward_prepared.1}
  #allocation0 [shape = 'u32[]', space=smem, size = 0x4, offset = 0x4, fixed_abs, tag = 'smem constant byte address 0x4 - core index']
  #allocation1 [shape = 'u32[144,128]{1,0:T(1,128)}', space=vmem, size = 0x12000, scoped, tag = 'internal scratch']
  %s0 = inlined_call_operand.vmem [shape: f32[8,32], index: 0, kind: input, shape index: {}]
  %s1 = inlined_call_operand.vmem [shape: f32[32,16], index: 1, kind: input, shape index: {}]
  %s2 = inlined_call_operand.vmem [shape: f32[1,16], index: 2, kind: input, shape index: {}]
  %s3 = inlined_call_operand.hbm [shape: f32[8,16], index: 3, kind: output, shape index: {}]
  %s4 = sld [smem:[#allocation0]]
  $region22: #{linear_forward_prepared.1} parent=0
    _
  %s6 = ssub.s32 1, %s4
  %s7 = scalar_select 0, %s6, %s4
  $region1: #{linear_forward_prepared.1} parent=0
    #allocation2 [shape = 'u8[4096]{0}', space=vmem, size = 0x1000, scoped, tag = 'output window, operand 0, single buffered']
    #allocation3 [shape = 's32[1]{0}', space=sflag, size = 0x4, scoped, tag = 'scoped memory for linear_forward_prepared.1']
    %8 = vsyncpa [#allocation3], 0
    // Predicated region
    $region2: #{linear_forward_prepared.1} parent=1 // pred_check
      _
    $region3: #{linear_forward_prepared.1} parent=1 // pred_check_branch
      %10 = sbr.rel (0) target = $region5
    $region4: #{linear_forward_prepared.1} parent=1 // pred_region
      _
    $region5: #{linear_forward_prepared.1} parent=1 // pred_fallthru
      _
    // Predicated region
    $region6: #{linear_forward_prepared.1} parent=1 // pred_check
      _
    $region7: #{linear_forward_prepared.1} parent=1 // pred_check_branch
      %12 = sbr.rel (0) target = $region9
    $region8: #{linear_forward_prepared.1} parent=1 // pred_region
      _
    $region9: #{linear_forward_prepared.1} parent=1 // pred_fallthru
      _
    // Predicated region
    $region10: #{linear_forward_prepared.1} parent=1 // pred_check
      _
    $region11: #{linear_forward_prepared.1} parent=1 // pred_check_branch
      %14 = sbr.rel (0) target = $region13
    $region12: #{linear_forward_prepared.1} parent=1 // pred_region
      _
    $region13: #{linear_forward_prepared.1} parent=1 // pred_fallthru
      _
    %v15 = vld [vmem:[%s0] sm:$0xff]
    %v16 = vld [vmem:[%s1] sm:$0xff]
    %v17 = vld [vmem:[%s1 + $0x8] sm:$0xff]
    %v18 = vld [vmem:[%s1 + $0x10] sm:$0xff]
    %v19 = vld [vmem:[%s1 + $0x18] sm:$0xff]
    %v20 = vld [vmem:[%s2] sm:$0x1]
    %v22 = vlaneseq
    %v23 = vshrl.u32 %v22, 7
    %v24 = vsub.s32 0, %v23
    %v25 = vrot.slane %v20, %v24
    %vm27 = vcmask 261120
    %v29 = vsel %vm27, %v15, 0
    %31 = vmatprep.subr.mxu0 0.0
    %32 = vmatpush1.msra.mxu0 %v16
    %33 = vmatprep.subr.mxu0 0.0
    %34 = vmatpush1.msra.mxu0 %v17
    %35 = vmatprep.subr.mxu0 0.0
    %36 = vmatpush1.msra.mxu0 %v18
    %37 = vmatprep.subr.mxu0 0.0
    %38 = vmatpush1.msra.mxu0 %v19
    %39 = vmatprep.subr.mxu0 0.0
    %40 = vmatpush1.msra.mxu0 0.0
    %41 = vmatprep.subr.mxu0 0.0
    %42 = vmatpush1.msra.mxu0 0.0
    %43 = vmatprep.subr.mxu0 0.0
    %44 = vmatpush1.msra.mxu0 0.0
    %45 = vmatprep.subr.mxu0 0.0
    %46 = vmatpush1.msra.mxu0 0.0
    %47 = vmatprep.subr.mxu0 0.0
    %48 = vmatpush1.msra.mxu0 0.0
    %49 = vmatprep.subr.mxu0 0.0
    %50 = vmatpush1.msra.mxu0 0.0
    %51 = vmatprep.subr.mxu0 0.0
    %52 = vmatpush1.msra.mxu0 0.0
    %53 = vmatprep.subr.mxu0 0.0
    %54 = vmatpush1.msra.mxu0 0.0
    %55 = vmatprep.subr.mxu0 0.0
    %56 = vmatpush1.msra.mxu0 0.0
    %57 = vmatprep.subr.mxu0 0.0
    %58 = vmatpush1.msra.mxu0 0.0
    %59 = vmatprep.subr.mxu0 0.0
    %60 = vmatpush1.msra.mxu0 0.0
    %61 = vmatprep.subr.mxu0 0.0
    %62 = vmatpush1.msra.mxu0 0.0
    %63 = vmatprep.subr.mxu0 0.0
    %64 = vmatpush1.msra.mxu0 0.0
    %65 = vmatprep.subr.mxu0 0.0
    %66 = vmatpush1.msra.mxu0 0.0
    %67 = vmatprep.subr.mxu0 0.0
    %68 = vmatpush1.msra.mxu0 0.0
    %69 = vmatprep.subr.mxu0 0.0
    %70 = vmatpush1.msra.mxu0 0.0
    %71 = vmatprep.subr.mxu0 0.0
    %72 = vmatpush1.msra.mxu0 0.0
    %73 = vmatprep.subr.mxu0 0.0
    %74 = vmatpush1.msra.mxu0 0.0
    %75 = vmatprep.subr.mxu0 0.0
    %76 = vmatpush1.msra.mxu0 0.0
    %77 = vmatprep.subr.mxu0 0.0
    %78 = vmatpush1.msra.mxu0 0.0
    %79 = vmatprep.subr.mxu0 0.0
    %80 = vmatpush1.msra.mxu0 0.0
    %81 = vmatprep.subr.mxu0 0.0
    %82 = vmatpush1.msra.mxu0 0.0
    %83 = vmatprep.subr.mxu0 0.0
    %84 = vmatpush1.msra.mxu0 0.0
    %85 = vmatprep.subr.mxu0 0.0
    %86 = vmatpush1.msra.mxu0 0.0
    %87 = vmatprep.subr.mxu0 0.0
    %88 = vmatpush1.msra.mxu0 0.0
    %89 = vmatprep.subr.mxu0 0.0
    %90 = vmatpush1.msra.mxu0 0.0
    %91 = vmatprep.subr.mxu0 0.0
    %92 = vmatpush1.msra.mxu0 0.0
    %93 = vmatprep.subr.mxu0 0.0
    %94 = vmatpush1.msra.mxu0 0.0
    %95 = vmatprep.mubr.f32.mxu0 0.0
    %96 = vmatmul.mubr.f32.gmra.mrb[0].mxu0 %v29
    %v97 = vpop.f32.mrb[0].mxu0
    %v98 = vadd.f32 %v25, %v97
    %v99 = vpop.f32.mrb[0].mxu0
    %100 = vdwg.mxu0
    %vm101 = vcmask 130048
    %102 = vst.msk [vmem:[#allocation2] sm:$0xff] %vm101, %v98
    // Predicated region
    $region14: #{linear_forward_prepared.1} parent=1 // pred_check
      _
    $region15: #{linear_forward_prepared.1} parent=1 // pred_check_branch
      %104 = sbr.rel (0) target = $region17
    $region16: #{linear_forward_prepared.1} parent=1 // pred_region
      %s106 = ssub.s32 128, 128
      %107 = vsyncadd [#allocation3], %s106
      %s109 = sshll.u32 [#allocation2], 4
      %s110 = int_to_ptr.vmem [resolvable:$true] %s109
      %112 = dma.vmem_to_hbm [thread:$0]  %s110, 128, %s3, [#allocation3]
    $region17: #{linear_forward_prepared.1} parent=1 // pred_fallthru
      _
    // Predicated region
    $region18: #{linear_forward_prepared.1} parent=1 // pred_check
      _
    $region19: #{linear_forward_prepared.1} parent=1 // pred_check_branch
      %114 = sbr.rel (0) target = $region21
    $region20: #{linear_forward_prepared.1} parent=1 // pred_region
      %115 = dma.done [#allocation3], 128
    $region21: #{linear_forward_prepared.1} parent=1 // pred_fallthru
      _
    %116 = vsyncpa [#allocation3], 1

</llo_original>
